<compile_context>
chip_gen: v7x
topology: tpu7x:2x2x1
jax: 0.10.0
libtpu: 0.0.40
codegen_flags: <defaults>
</compile_context>

<pallas_src>
import functools

import jax
import jax.numpy as jnp
from jax.experimental import pallas as pl
from jax.experimental.pallas import tpu as pltpu

IN_F = 1000
HID_F = 100
OUT_F = 10
DROP_P = 0.2
# keep an element iff hash31 >= threshold  =>  P(keep) = 1 - DROP_P
_DROP_THRESH_I31 = int(round(DROP_P * (1 << 31)))


def _net_kernel(seed_ref, x_ref, w1_ref, b1_ref, w2_ref, b2_ref, o_ref):
    # ---- fc1 + relu (MXU matmul, f32 accumulate) ----
    h = jnp.dot(x_ref[...], w1_ref[...], preferred_element_type=jnp.float32)
    h = jnp.maximum(h + b1_ref[...], 0.0)                    # (TM,100)+(1,100)

    # ---- dropout(p=0.2), training mode ----
    # Stateless counter-based hash (murmur3 fmix32 style) over the global
    # element index and the user seed.  Pure int32/uint32 VPU ops -> lowers on
    # Mosaic and in interpret mode; each batch tile gets a distinct stream.
    tm, hid = h.shape
    row = jax.lax.broadcasted_iota(jnp.int32, (tm, hid), 0) + pl.program_id(0) * tm
    col = jax.lax.broadcasted_iota(jnp.int32, (tm, hid), 1)
    gid = (row * hid + col).astype(jnp.uint32)
    seed_u32 = seed_ref[0].astype(jnp.uint32)

    k = gid * jnp.uint32(0x9E3779B1) + seed_u32
    k = k ^ (k >> 16)
    k = k * jnp.uint32(0x85EBCA6B)
    k = k ^ (k >> 13)
    k = k * jnp.uint32(0xC2B2AE35)
    k = k ^ (k >> 16)

    r31 = (k & jnp.uint32(0x7FFFFFFF)).astype(jnp.int32)     # uniform in [0, 2^31)
    keep = r31 >= jnp.int32(_DROP_THRESH_I31)                # P(keep) = 0.8
    h = jnp.where(keep, h, 0.0)                              # 1/(1-p) folded into w2

    # ---- fc2 (w2 already carries the 1/(1-p) dropout scale) ----
    o_ref[...] = (
        jnp.dot(h, w2_ref[...], preferred_element_type=jnp.float32) + b2_ref[...]
    )


@functools.partial(jax.jit, static_argnames=("block_rows",))
def net_forward(x, w1, b1, w2, b2, seed, *, block_rows=512):
    """x: [B, 1000] f32 -> [B, 10] f32 (training-mode dropout active)."""
    B = x.shape[0]
    # Block rows: multiple of 8 (sublane granule) or the full batch.
    TM = block_rows if B > block_rows else B
    grid = (pl.cdiv(B, TM),)

    return pl.pallas_call(
        _net_kernel,
        out_shape=jax.ShapeDtypeStruct((B, OUT_F), jnp.float32),
        grid=grid,
        in_specs=[
            # seed: tiny scalar, lives in SMEM, same every step
            pl.BlockSpec(memory_space=pltpu.MemorySpace.SMEM),
            # x: tiled over the batch -> double-buffered DMA overlaps compute
            pl.BlockSpec((TM, IN_F), lambda i: (i, 0)),
            # weights / biases: constant index_map -> DMA'd once, VMEM-resident
            pl.BlockSpec((IN_F, HID_F), lambda i: (0, 0)),
            pl.BlockSpec((1, HID_F), lambda i: (0, 0)),
            pl.BlockSpec((HID_F, OUT_F), lambda i: (0, 0)),
            pl.BlockSpec((1, OUT_F), lambda i: (0, 0)),
        ],
        out_specs=pl.BlockSpec((TM, OUT_F), lambda i: (i, 0)),
        compiler_params=pltpu.CompilerParams(
            dimension_semantics=("parallel",),
        ),
    )(seed, x, w1, b1, w2, b2)


def init_params(key):
    """Deterministic init matching nn.Linear(1000,100)/nn.Linear(100,10) shapes.
    Stored transposed: w1 [1000,100], w2 [100,10]; biases as 2-D rows.
    NOTE: w2 is pre-multiplied by 1/(1-p) so the kernel's dropout is a pure
    compare+select (fc2 is linear, so this is mathematically identical)."""
    k1, k2, k3, k4 = jax.random.split(key, 4)
    bound1 = 1.0 / (IN_F ** 0.5)
    bound2 = 1.0 / (HID_F ** 0.5)
    w1 = jax.random.uniform(k1, (IN_F, HID_F), jnp.float32, -bound1, bound1)
    b1 = jax.random.uniform(k2, (1, HID_F), jnp.float32, -bound1, bound1)
    w2 = jax.random.uniform(k3, (HID_F, OUT_F), jnp.float32, -bound2, bound2)
    w2 = w2 * jnp.float32(1.0 / (1.0 - DROP_P))   # fold inverted-dropout scale
    b2 = jax.random.uniform(k4, (1, OUT_F), jnp.float32, -bound2, bound2)
    return w1, b1, w2, b2


if __name__ == "__main__":
    key = jax.random.PRNGKey(0)
    kx, kp = jax.random.split(key)

    B = 8
    x = jax.random.normal(kx, (B, IN_F), jnp.float32)
    w1, b1, w2, b2 = init_params(kp)
    seed = jnp.array([1234], dtype=jnp.int32)

    y = net_forward(x, w1, b1, w2, b2, seed)
    y = jax.block_until_ready(y)

    assert y.shape == (B, OUT_F), y.shape
    assert y.dtype == jnp.float32
    assert bool(jnp.all(jnp.isfinite(y)))
    print("KERNEL_OK")
</pallas_src>

<mosaic_0001>
module attributes {stable_mosaic.version = 11 : i64} {
  func.func @_net_kernel(%arg0: i32, %arg1: memref<1xi32, #tpu.memory_space<smem>>, %arg2: memref<8x1000xf32, #tpu.memory_space<vmem>>, %arg3: memref<1000x100xf32, #tpu.memory_space<vmem>>, %arg4: memref<1x100xf32, #tpu.memory_space<vmem>>, %arg5: memref<100x10xf32, #tpu.memory_space<vmem>>, %arg6: memref<1x10xf32, #tpu.memory_space<vmem>>, %arg7: memref<8x10xf32, #tpu.memory_space<vmem>>) attributes {dimension_semantics = [#tpu.dimension_semantics<parallel>], iteration_bounds = array<i64: 1>, scalar_prefetch = 0 : i64, scratch_operands = 0 : i64, tpu.core_type = #tpu.core_type<tc>, window_params = [{transform_indices = @transform_0, window_bounds = array<i64: 1>}, {transform_indices = @transform_1, window_bounds = array<i64: 8, 1000>}, {pipeline_mode = #tpu.pipeline_mode<synchronous>, transform_indices = @transform_2, window_bounds = array<i64: 1000, 100>}, {pipeline_mode = #tpu.pipeline_mode<synchronous>, transform_indices = @transform_3, window_bounds = array<i64: 1, 100>}, {pipeline_mode = #tpu.pipeline_mode<synchronous>, transform_indices = @transform_4, window_bounds = array<i64: 100, 10>}, {pipeline_mode = #tpu.pipeline_mode<synchronous>, transform_indices = @transform_5, window_bounds = array<i64: 1, 10>}, {transform_indices = @transform_6, window_bounds = array<i64: 8, 10>}]} {
    %c0 = arith.constant 0 : index
    %c0_0 = arith.constant 0 : index
    %0 = vector.load %arg2[%c0, %c0_0] : memref<8x1000xf32, #tpu.memory_space<vmem>>, vector<8x1000xf32>
    %c0_1 = arith.constant 0 : index
    %c0_2 = arith.constant 0 : index
    %1 = vector.load %arg3[%c0_1, %c0_2] : memref<1000x100xf32, #tpu.memory_space<vmem>>, vector<1000x100xf32>
    %cst = arith.constant dense<0.000000e+00> : vector<8x100xf32>
    %2 = tpu.matmul %0, %1, %cst {dimension_numbers = #tpu.dot_dimension_numbers<[1], [0], [0], [1], [0, 0, 1, 1], [], []>} : vector<8x1000xf32>, vector<1000x100xf32>, vector<8x100xf32> -> vector<8x100xf32>
    %c0_3 = arith.constant 0 : index
    %c0_4 = arith.constant 0 : index
    %3 = vector.load %arg4[%c0_3, %c0_4] : memref<1x100xf32, #tpu.memory_space<vmem>>, vector<1x100xf32>
    %4 = vector.broadcast %3 : vector<1x100xf32> to vector<8x100xf32>
    %5 = arith.addf %2, %4 : vector<8x100xf32>
    %cst_5 = arith.constant 0.000000e+00 : f32
    %6 = vector.broadcast %cst_5 : f32 to vector<8x100xf32>
    %7 = arith.maximumf %5, %6 : vector<8x100xf32>
    %8 = tpu.iota {dimensions = array<i32: 0>} : vector<8x100xi32>
    %c8_i32 = arith.constant 8 : i32
    %9 = arith.muli %arg0, %c8_i32 : i32
    %10 = vector.broadcast %9 : i32 to vector<8x100xi32>
    %11 = arith.addi %8, %10 : vector<8x100xi32>
    %12 = tpu.iota {dimensions = array<i32: 1>} : vector<8x100xi32>
    %c100_i32 = arith.constant 100 : i32
    %13 = vector.broadcast %c100_i32 : i32 to vector<8x100xi32>
    %14 = arith.muli %11, %13 : vector<8x100xi32>
    %15 = arith.addi %14, %12 : vector<8x100xi32>
    %c0_6 = arith.constant 0 : index
    %16 = memref.load %arg1[%c0_6] : memref<1xi32, #tpu.memory_space<smem>>
    %c-1640531535_i32 = arith.constant -1640531535 : i32
    %17 = vector.broadcast %c-1640531535_i32 : i32 to vector<8x100xi32>
    %18 = arith.muli %15, %17 : vector<8x100xi32>
    %19 = vector.broadcast %16 : i32 to vector<8x100xi32>
    %20 = arith.addi %18, %19 : vector<8x100xi32>
    %c16_i32 = arith.constant 16 : i32
    %21 = vector.broadcast %c16_i32 : i32 to vector<8x100xi32>
    %22 = arith.shrui %20, %21 : vector<8x100xi32>
    %23 = arith.xori %20, %22 : vector<8x100xi32>
    %c-2048144789_i32 = arith.constant -2048144789 : i32
    %24 = vector.broadcast %c-2048144789_i32 : i32 to vector<8x100xi32>
    %25 = arith.muli %23, %24 : vector<8x100xi32>
    %c13_i32 = arith.constant 13 : i32
    %26 = vector.broadcast %c13_i32 : i32 to vector<8x100xi32>
    %27 = arith.shrui %25, %26 : vector<8x100xi32>
    %28 = arith.xori %25, %27 : vector<8x100xi32>
    %c-1028477387_i32 = arith.constant -1028477387 : i32
    %29 = vector.broadcast %c-1028477387_i32 : i32 to vector<8x100xi32>
    %30 = arith.muli %28, %29 : vector<8x100xi32>
    %c16_i32_7 = arith.constant 16 : i32
    %31 = vector.broadcast %c16_i32_7 : i32 to vector<8x100xi32>
    %32 = arith.shrui %30, %31 : vector<8x100xi32>
    %33 = arith.xori %30, %32 : vector<8x100xi32>
    %c2147483647_i32 = arith.constant 2147483647 : i32
    %34 = vector.broadcast %c2147483647_i32 : i32 to vector<8x100xi32>
    %35 = arith.andi %33, %34 : vector<8x100xi32>
    %c429496730_i32 = arith.constant 429496730 : i32
    %36 = vector.broadcast %c429496730_i32 : i32 to vector<8x100xi32>
    %37 = arith.cmpi sge, %35, %36 : vector<8x100xi32>
    %cst_8 = arith.constant 0.000000e+00 : f32
    %38 = vector.broadcast %cst_8 : f32 to vector<8x100xf32>
    %39 = arith.select %37, %7, %38 : vector<8x100xi1>, vector<8x100xf32>
    %c0_9 = arith.constant 0 : index
    %c0_10 = arith.constant 0 : index
    %40 = vector.load %arg5[%c0_9, %c0_10] : memref<100x10xf32, #tpu.memory_space<vmem>>, vector<100x10xf32>
    %cst_11 = arith.constant dense<0.000000e+00> : vector<8x10xf32>
    %41 = tpu.matmul %39, %40, %cst_11 {dimension_numbers = #tpu.dot_dimension_numbers<[1], [0], [0], [1], [0, 0, 1, 1], [], []>} : vector<8x100xf32>, vector<100x10xf32>, vector<8x10xf32> -> vector<8x10xf32>
    %c0_12 = arith.constant 0 : index
    %c0_13 = arith.constant 0 : index
    %42 = vector.load %arg6[%c0_12, %c0_13] : memref<1x10xf32, #tpu.memory_space<vmem>>, vector<1x10xf32>
    %43 = vector.broadcast %42 : vector<1x10xf32> to vector<8x10xf32>
    %44 = arith.addf %41, %43 : vector<8x10xf32>
    %c0_14 = arith.constant 0 : index
    %c0_15 = arith.constant 0 : index
    %45 = vector.load %arg7[%c0_14, %c0_15] : memref<8x10xf32, #tpu.memory_space<vmem>>, vector<8x10xf32>
    tpu.vector_store %arg7[%c0_14, %c0_15], %44 {strides = array<i32>} : memref<8x10xf32, #tpu.memory_space<vmem>>, vector<8x10xf32>,
    return
  }
  func.func @transform_0(%arg0: i32) -> i32 {
    %c0_i32 = arith.constant 0 : i32
    %c0_i32_0 = arith.constant 0 : i32
    return %c0_i32 : i32
  }
  func.func @transform_1(%arg0: i32) -> (i32, i32) {
    %c0_i32 = arith.constant 0 : i32
    %c0_i32_0 = arith.constant 0 : i32
    return %arg0, %c0_i32 : i32, i32
  }
  func.func @transform_2(%arg0: i32) -> (i32, i32) {
    %c0_i32 = arith.constant 0 : i32
    %c0_i32_0 = arith.constant 0 : i32
    %c0_i32_1 = arith.constant 0 : i32
    return %c0_i32, %c0_i32_0 : i32, i32
  }
  func.func @transform_3(%arg0: i32) -> (i32, i32) {
    %c0_i32 = arith.constant 0 : i32
    %c0_i32_0 = arith.constant 0 : i32
    %c0_i32_1 = arith.constant 0 : i32
    return %c0_i32, %c0_i32_0 : i32, i32
  }
  func.func @transform_4(%arg0: i32) -> (i32, i32) {
    %c0_i32 = arith.constant 0 : i32
    %c0_i32_0 = arith.constant 0 : i32
    %c0_i32_1 = arith.constant 0 : i32
    return %c0_i32, %c0_i32_0 : i32, i32
  }
  func.func @transform_5(%arg0: i32) -> (i32, i32) {
    %c0_i32 = arith.constant 0 : i32
    %c0_i32_0 = arith.constant 0 : i32
    %c0_i32_1 = arith.constant 0 : i32
    return %c0_i32, %c0_i32_0 : i32, i32
  }
  func.func @transform_6(%arg0: i32) -> (i32, i32) {
    %c0_i32 = arith.constant 0 : i32
    %c0_i32_0 = arith.constant 0 : i32
    return %arg0, %c0_i32 : i32, i32
  }
}

</mosaic_0001>

<llo_original>
// kernel: net_forward.1
$region0: #{net_forward.1}
  #allocation0 [shape = 'u32[]', space=smem, size = 0x4, offset = 0x4, fixed_abs, tag = 'smem constant byte address 0x4 - core index']
  #allocation1 [shape = 'u32[144,128]{1,0:T(1,128)}', space=vmem, size = 0x12000, scoped, tag = 'internal scratch']
  #allocation2 [shape = 's32[1]{0:T(128)S(6)}', space=smem, size = 0x200, scoped, tag = 'scoped memory for net_forward.1']
  %s0 = inlined_call_operand.<no memory space> [shape: s32[1], index: 0, kind: input, shape index: {}]
  %s1 = inlined_call_operand.vmem [shape: f32[8,1000], index: 1, kind: input, shape index: {}]
  %s2 = inlined_call_operand.vmem [shape: f32[1000,100], index: 2, kind: input, shape index: {}]
  %s3 = inlined_call_operand.vmem [shape: f32[1,100], index: 3, kind: input, shape index: {}]
  %s4 = inlined_call_operand.vmem [shape: f32[100,10], index: 4, kind: input, shape index: {}]
  %s5 = inlined_call_operand.vmem [shape: f32[1,10], index: 5, kind: input, shape index: {}]
  %s6 = inlined_call_operand.hbm [shape: f32[8,10], index: 6, kind: output, shape index: {}]
  %s7 = sld [smem:[#allocation0]]
  $region34: #{net_forward.1} parent=0
    _
  %s9 = ssub.s32 1, %s7
  %s10 = scalar_select 0, %s9, %s7
  %11 = sst [smem:[#allocation2]] %s0
  $region1: #{net_forward.1} parent=0
    #allocation3 [shape = 'u8[4096]{0}', space=vmem, size = 0x1000, scoped, tag = 'output window, operand 0, single buffered']
    #allocation4 [shape = 's32[1]{0}', space=sflag, size = 0x4, scoped, tag = 'scoped memory for net_forward.1']
    %12 = vsyncpa [#allocation4], 0
    // Predicated region
    $region2: #{net_forward.1} parent=1 // pred_check
      _
    $region3: #{net_forward.1} parent=1 // pred_check_branch
      %14 = sbr.rel (0) target = $region5
    $region4: #{net_forward.1} parent=1 // pred_region
      _
    $region5: #{net_forward.1} parent=1 // pred_fallthru
      _
    // Predicated region
    $region6: #{net_forward.1} parent=1 // pred_check
      _
    $region7: #{net_forward.1} parent=1 // pred_check_branch
      %16 = sbr.rel (0) target = $region9
    $region8: #{net_forward.1} parent=1 // pred_region
      _
    $region9: #{net_forward.1} parent=1 // pred_fallthru
      _
    // Predicated region
    $region10: #{net_forward.1} parent=1 // pred_check
      _
    $region11: #{net_forward.1} parent=1 // pred_check_branch
      %18 = sbr.rel (0) target = $region13
    $region12: #{net_forward.1} parent=1 // pred_region
      _
    $region13: #{net_forward.1} parent=1 // pred_fallthru
      _
    // Predicated region
    $region14: #{net_forward.1} parent=1 // pred_check
      _
    $region15: #{net_forward.1} parent=1 // pred_check_branch
      %20 = sbr.rel (0) target = $region17
    $region16: #{net_forward.1} parent=1 // pred_region
      _
    $region17: #{net_forward.1} parent=1 // pred_fallthru
      _
    // Predicated region
    $region18: #{net_forward.1} parent=1 // pred_check
      _
    $region19: #{net_forward.1} parent=1 // pred_check_branch
      %22 = sbr.rel (0) target = $region21
    $region20: #{net_forward.1} parent=1 // pred_region
      _
    $region21: #{net_forward.1} parent=1 // pred_fallthru
      _
    // Predicated region
    $region22: #{net_forward.1} parent=1 // pred_check
      _
    $region23: #{net_forward.1} parent=1 // pred_check_branch
      %24 = sbr.rel (0) target = $region25
    $region24: #{net_forward.1} parent=1 // pred_region
      _
    $region25: #{net_forward.1} parent=1 // pred_fallthru
      _
    %v25 = vld [vmem:[%s1] sm:$0xff]
    %v26 = vld [vmem:[%s1 + $0x8] sm:$0xff]
    %v27 = vld [vmem:[%s1 + $0x10] sm:$0xff]
    %v28 = vld [vmem:[%s1 + $0x18] sm:$0xff]
    %v29 = vld [vmem:[%s1 + $0x20] sm:$0xff]
    %v30 = vld [vmem:[%s1 + $0x28] sm:$0xff]
    %v31 = vld [vmem:[%s1 + $0x30] sm:$0xff]
    %v32 = vld [vmem:[%s1 + $0x38] sm:$0xff]
    %v33 = vld [vmem:[%s2] sm:$0xff]
    %v34 = vld [vmem:[%s2 + $0x8] sm:$0xff]
    %v35 = vld [vmem:[%s2 + $0x10] sm:$0xff]
    %v36 = vld [vmem:[%s2 + $0x18] sm:$0xff]
    %v37 = vld [vmem:[%s2 + $0x20] sm:$0xff]
    %v38 = vld [vmem:[%s2 + $0x28] sm:$0xff]
    %v39 = vld [vmem:[%s2 + $0x30] sm:$0xff]
    %v40 = vld [vmem:[%s2 + $0x38] sm:$0xff]
    %v41 = vld [vmem:[%s2 + $0x40] sm:$0xff]
    %v42 = vld [vmem:[%s2 + $0x48] sm:$0xff]
    %v43 = vld [vmem:[%s2 + $0x50] sm:$0xff]
    %v44 = vld [vmem:[%s2 + $0x58] sm:$0xff]
    %v45 = vld [vmem:[%s2 + $0x60] sm:$0xff]
    %v46 = vld [vmem:[%s2 + $0x68] sm:$0xff]
    %v47 = vld [vmem:[%s2 + $0x70] sm:$0xff]
    %v48 = vld [vmem:[%s2 + $0x78] sm:$0xff]
    %v49 = vld [vmem:[%s2 + $0x80] sm:$0xff]
    %v50 = vld [vmem:[%s2 + $0x88] sm:$0xff]
    %v51 = vld [vmem:[%s2 + $0x90] sm:$0xff]
    %v52 = vld [vmem:[%s2 + $0x98] sm:$0xff]
    %v53 = vld [vmem:[%s2 + $0xa0] sm:$0xff]
    %v54 = vld [vmem:[%s2 + $0xa8] sm:$0xff]
    %v55 = vld [vmem:[%s2 + $0xb0] sm:$0xff]
    %v56 = vld [vmem:[%s2 + $0xb8] sm:$0xff]
    %v57 = vld [vmem:[%s2 + $0xc0] sm:$0xff]
    %v58 = vld [vmem:[%s2 + $0xc8] sm:$0xff]
    %v59 = vld [vmem:[%s2 + $0xd0] sm:$0xff]
    %v60 = vld [vmem:[%s2 + $0xd8] sm:$0xff]
    %v61 = vld [vmem:[%s2 + $0xe0] sm:$0xff]
    %v62 = vld [vmem:[%s2 + $0xe8] sm:$0xff]
    %v63 = vld [vmem:[%s2 + $0xf0] sm:$0xff]
    %v64 = vld [vmem:[%s2 + $0xf8] sm:$0xff]
    %v65 = vld [vmem:[%s2 + $0x100] sm:$0xff]
    %v66 = vld [vmem:[%s2 + $0x108] sm:$0xff]
    %v67 = vld [vmem:[%s2 + $0x110] sm:$0xff]
    %v68 = vld [vmem:[%s2 + $0x118] sm:$0xff]
    %v69 = vld [vmem:[%s2 + $0x120] sm:$0xff]
    %v70 = vld [vmem:[%s2 + $0x128] sm:$0xff]
    %v71 = vld [vmem:[%s2 + $0x130] sm:$0xff]
    %v72 = vld [vmem:[%s2 + $0x138] sm:$0xff]
    %v73 = vld [vmem:[%s2 + $0x140] sm:$0xff]
    %v74 = vld [vmem:[%s2 + $0x148] sm:$0xff]
    %v75 = vld [vmem:[%s2 + $0x150] sm:$0xff]
    %v76 = vld [vmem:[%s2 + $0x158] sm:$0xff]
    %v77 = vld [vmem:[%s2 + $0x160] sm:$0xff]
    %v78 = vld [vmem:[%s2 + $0x168] sm:$0xff]
    %v79 = vld [vmem:[%s2 + $0x170] sm:$0xff]
    %v80 = vld [vmem:[%s2 + $0x178] sm:$0xff]
    %v81 = vld [vmem:[%s2 + $0x180] sm:$0xff]
    %v82 = vld [vmem:[%s2 + $0x188] sm:$0xff]
    %v83 = vld [vmem:[%s2 + $0x190] sm:$0xff]
    %v84 = vld [vmem:[%s2 + $0x198] sm:$0xff]
    %v85 = vld [vmem:[%s2 + $0x1a0] sm:$0xff]
    %v86 = vld [vmem:[%s2 + $0x1a8] sm:$0xff]
    %v87 = vld [vmem:[%s2 + $0x1b0] sm:$0xff]
    %v88 = vld [vmem:[%s2 + $0x1b8] sm:$0xff]
    %v89 = vld [vmem:[%s2 + $0x1c0] sm:$0xff]
    %v90 = vld [vmem:[%s2 + $0x1c8] sm:$0xff]
    %v91 = vld [vmem:[%s2 + $0x1d0] sm:$0xff]
    %v92 = vld [vmem:[%s2 + $0x1d8] sm:$0xff]
    %v93 = vld [vmem:[%s2 + $0x1e0] sm:$0xff]
    %v94 = vld [vmem:[%s2 + $0x1e8] sm:$0xff]
    %v95 = vld [vmem:[%s2 + $0x1f0] sm:$0xff]
    %v96 = vld [vmem:[%s2 + $0x1f8] sm:$0xff]
    %v97 = vld [vmem:[%s2 + $0x200] sm:$0xff]
    %v98 = vld [vmem:[%s2 + $0x208] sm:$0xff]
    %v99 = vld [vmem:[%s2 + $0x210] sm:$0xff]
    %v100 = vld [vmem:[%s2 + $0x218] sm:$0xff]
    %v101 = vld [vmem:[%s2 + $0x220] sm:$0xff]
    %v102 = vld [vmem:[%s2 + $0x228] sm:$0xff]
    %v103 = vld [vmem:[%s2 + $0x230] sm:$0xff]
    %v104 = vld [vmem:[%s2 + $0x238] sm:$0xff]
    %v105 = vld [vmem:[%s2 + $0x240] sm:$0xff]
    %v106 = vld [vmem:[%s2 + $0x248] sm:$0xff]
    %v107 = vld [vmem:[%s2 + $0x250] sm:$0xff]
    %v108 = vld [vmem:[%s2 + $0x258] sm:$0xff]
    %v109 = vld [vmem:[%s2 + $0x260] sm:$0xff]
    %v110 = vld [vmem:[%s2 + $0x268] sm:$0xff]
    %v111 = vld [vmem:[%s2 + $0x270] sm:$0xff]
    %v112 = vld [vmem:[%s2 + $0x278] sm:$0xff]
    %v113 = vld [vmem:[%s2 + $0x280] sm:$0xff]
    %v114 = vld [vmem:[%s2 + $0x288] sm:$0xff]
    %v115 = vld [vmem:[%s2 + $0x290] sm:$0xff]
    %v116 = vld [vmem:[%s2 + $0x298] sm:$0xff]
    %v117 = vld [vmem:[%s2 + $0x2a0] sm:$0xff]
    %v118 = vld [vmem:[%s2 + $0x2a8] sm:$0xff]
    %v119 = vld [vmem:[%s2 + $0x2b0] sm:$0xff]
    %v120 = vld [vmem:[%s2 + $0x2b8] sm:$0xff]
    %v121 = vld [vmem:[%s2 + $0x2c0] sm:$0xff]
    %v122 = vld [vmem:[%s2 + $0x2c8] sm:$0xff]
    %v123 = vld [vmem:[%s2 + $0x2d0] sm:$0xff]
    %v124 = vld [vmem:[%s2 + $0x2d8] sm:$0xff]
    %v125 = vld [vmem:[%s2 + $0x2e0] sm:$0xff]
    %v126 = vld [vmem:[%s2 + $0x2e8] sm:$0xff]
    %v127 = vld [vmem:[%s2 + $0x2f0] sm:$0xff]
    %v128 = vld [vmem:[%s2 + $0x2f8] sm:$0xff]
    %v129 = vld [vmem:[%s2 + $0x300] sm:$0xff]
    %v130 = vld [vmem:[%s2 + $0x308] sm:$0xff]
    %v131 = vld [vmem:[%s2 + $0x310] sm:$0xff]
    %v132 = vld [vmem:[%s2 + $0x318] sm:$0xff]
    %v133 = vld [vmem:[%s2 + $0x320] sm:$0xff]
    %v134 = vld [vmem:[%s2 + $0x328] sm:$0xff]
    %v135 = vld [vmem:[%s2 + $0x330] sm:$0xff]
    %v136 = vld [vmem:[%s2 + $0x338] sm:$0xff]
    %v137 = vld [vmem:[%s2 + $0x340] sm:$0xff]
    %v138 = vld [vmem:[%s2 + $0x348] sm:$0xff]
    %v139 = vld [vmem:[%s2 + $0x350] sm:$0xff]
    %v140 = vld [vmem:[%s2 + $0x358] sm:$0xff]
    %v141 = vld [vmem:[%s2 + $0x360] sm:$0xff]
    %v142 = vld [vmem:[%s2 + $0x368] sm:$0xff]
    %v143 = vld [vmem:[%s2 + $0x370] sm:$0xff]
    %v144 = vld [vmem:[%s2 + $0x378] sm:$0xff]
    %v145 = vld [vmem:[%s2 + $0x380] sm:$0xff]
    %v146 = vld [vmem:[%s2 + $0x388] sm:$0xff]
    %v147 = vld [vmem:[%s2 + $0x390] sm:$0xff]
    %v148 = vld [vmem:[%s2 + $0x398] sm:$0xff]
    %v149 = vld [vmem:[%s2 + $0x3a0] sm:$0xff]
    %v150 = vld [vmem:[%s2 + $0x3a8] sm:$0xff]
    %v151 = vld [vmem:[%s2 + $0x3b0] sm:$0xff]
    %v152 = vld [vmem:[%s2 + $0x3b8] sm:$0xff]
    %v153 = vld [vmem:[%s2 + $0x3c0] sm:$0xff]
    %v154 = vld [vmem:[%s2 + $0x3c8] sm:$0xff]
    %v155 = vld [vmem:[%s2 + $0x3d0] sm:$0xff]
    %v156 = vld [vmem:[%s2 + $0x3d8] sm:$0xff]
    %v157 = vld [vmem:[%s2 + $0x3e0] sm:$0xff]
    %v158 = vld [vmem:[%s3] sm:$0x1]
    %v160 = vlaneseq
    %v161 = vshrl.u32 %v160, 7
    %v162 = vsub.s32 0, %v161
    %v163 = vrot.slane %v158, %v162
    %vm165 = vcmask 850944
    %v167 = vsel %vm165, %v32, 0
    %169 = vmatprep.subr.mxu0 0.0
    %170 = vmatpush1.msra.mxu0 %v33
    %171 = vmatprep.subr.mxu0 0.0
    %172 = vmatpush1.msra.mxu0 %v34
    %173 = vmatprep.subr.mxu0 0.0
    %174 = vmatpush1.msra.mxu0 %v35
    %175 = vmatprep.subr.mxu0 0.0
    %176 = vmatpush1.msra.mxu0 %v36
    %177 = vmatprep.subr.mxu0 0.0
    %178 = vmatpush1.msra.mxu0 %v37
    %179 = vmatprep.subr.mxu0 0.0
    %180 = vmatpush1.msra.mxu0 %v38
    %181 = vmatprep.subr.mxu0 0.0
    %182 = vmatpush1.msra.mxu0 %v39
    %183 = vmatprep.subr.mxu0 0.0
    %184 = vmatpush1.msra.mxu0 %v40
    %185 = vmatprep.subr.mxu0 0.0
    %186 = vmatpush1.msra.mxu0 %v41
    %187 = vmatprep.subr.mxu0 0.0
    %188 = vmatpush1.msra.mxu0 %v42
    %189 = vmatprep.subr.mxu0 0.0
    %190 = vmatpush1.msra.mxu0 %v43
    %191 = vmatprep.subr.mxu0 0.0
    %192 = vmatpush1.msra.mxu0 %v44
    %193 = vmatprep.subr.mxu0 0.0
    %194 = vmatpush1.msra.mxu0 %v45
    %195 = vmatprep.subr.mxu0 0.0
    %196 = vmatpush1.msra.mxu0 %v46
    %197 = vmatprep.subr.mxu0 0.0
    %198 = vmatpush1.msra.mxu0 %v47
    %199 = vmatprep.subr.mxu0 0.0
    %200 = vmatpush1.msra.mxu0 %v48
    %201 = vmatprep.subr.mxu0 0.0
    %202 = vmatpush1.msra.mxu0 %v49
    %203 = vmatprep.subr.mxu0 0.0
    %204 = vmatpush1.msra.mxu0 %v50
    %205 = vmatprep.subr.mxu0 0.0
    %206 = vmatpush1.msra.mxu0 %v51
    %207 = vmatprep.subr.mxu0 0.0
    %208 = vmatpush1.msra.mxu0 %v52
    %209 = vmatprep.subr.mxu0 0.0
    %210 = vmatpush1.msra.mxu0 %v53
    %211 = vmatprep.subr.mxu0 0.0
    %212 = vmatpush1.msra.mxu0 %v54
    %213 = vmatprep.subr.mxu0 0.0
    %214 = vmatpush1.msra.mxu0 %v55
    %215 = vmatprep.subr.mxu0 0.0
    %216 = vmatpush1.msra.mxu0 %v56
    %217 = vmatprep.subr.mxu0 0.0
    %218 = vmatpush1.msra.mxu0 %v57
    %219 = vmatprep.subr.mxu0 0.0
    %220 = vmatpush1.msra.mxu0 %v58
    %221 = vmatprep.subr.mxu0 0.0
    %222 = vmatpush1.msra.mxu0 %v59
    %223 = vmatprep.subr.mxu0 0.0
    %224 = vmatpush1.msra.mxu0 %v60
    %225 = vmatprep.subr.mxu0 0.0
    %226 = vmatpush1.msra.mxu0 %v61
    %227 = vmatprep.subr.mxu0 0.0
    %228 = vmatpush1.msra.mxu0 %v62
    %229 = vmatprep.subr.mxu0 0.0
    %230 = vmatpush1.msra.mxu0 %v63
    %231 = vmatprep.subr.mxu0 0.0
    %232 = vmatpush1.msra.mxu0 %v64
    %233 = vmatprep.mubr.f32.mxu0 %v26
    %234 = vmatmul.mubr.f32.gmra.mrb[0].mxu0 %v25
    %v235 = vpop.f32.mrb[0].mxu0
    %v236 = vadd.f32 %v163, %v235
    %v237 = vpop.f32.mrb[0].mxu0
    %238 = vdwg.mxu0
    %239 = vmatprep.subr.mxu0 0.0
    %240 = vmatpush1.msra.mxu0 %v65
    %241 = vmatprep.subr.mxu0 0.0
    %242 = vmatpush1.msra.mxu0 %v66
    %243 = vmatprep.subr.mxu0 0.0
    %244 = vmatpush1.msra.mxu0 %v67
    %245 = vmatprep.subr.mxu0 0.0
    %246 = vmatpush1.msra.mxu0 %v68
    %247 = vmatprep.subr.mxu0 0.0
    %248 = vmatpush1.msra.mxu0 %v69
    %249 = vmatprep.subr.mxu0 0.0
    %250 = vmatpush1.msra.mxu0 %v70
    %251 = vmatprep.subr.mxu0 0.0
    %252 = vmatpush1.msra.mxu0 %v71
    %253 = vmatprep.subr.mxu0 0.0
    %254 = vmatpush1.msra.mxu0 %v72
    %255 = vmatprep.subr.mxu0 0.0
    %256 = vmatpush1.msra.mxu0 %v73
    %257 = vmatprep.subr.mxu0 0.0
    %258 = vmatpush1.msra.mxu0 %v74
    %259 = vmatprep.subr.mxu0 0.0
    %260 = vmatpush1.msra.mxu0 %v75
    %261 = vmatprep.subr.mxu0 0.0
    %262 = vmatpush1.msra.mxu0 %v76
    %263 = vmatprep.subr.mxu0 0.0
    %264 = vmatpush1.msra.mxu0 %v77
    %265 = vmatprep.subr.mxu0 0.0
    %266 = vmatpush1.msra.mxu0 %v78
    %267 = vmatprep.subr.mxu0 0.0
    %268 = vmatpush1.msra.mxu0 %v79
    %269 = vmatprep.subr.mxu0 0.0
    %270 = vmatpush1.msra.mxu0 %v80
    %271 = vmatprep.subr.mxu0 0.0
    %272 = vmatpush1.msra.mxu0 %v81
    %273 = vmatprep.subr.mxu0 0.0
    %274 = vmatpush1.msra.mxu0 %v82
    %275 = vmatprep.subr.mxu0 0.0
    %276 = vmatpush1.msra.mxu0 %v83
    %277 = vmatprep.subr.mxu0 0.0
    %278 = vmatpush1.msra.mxu0 %v84
    %279 = vmatprep.subr.mxu0 0.0
    %280 = vmatpush1.msra.mxu0 %v85
    %281 = vmatprep.subr.mxu0 0.0
    %282 = vmatpush1.msra.mxu0 %v86
    %283 = vmatprep.subr.mxu0 0.0
    %284 = vmatpush1.msra.mxu0 %v87
    %285 = vmatprep.subr.mxu0 0.0
    %286 = vmatpush1.msra.mxu0 %v88
    %287 = vmatprep.subr.mxu0 0.0
    %288 = vmatpush1.msra.mxu0 %v89
    %289 = vmatprep.subr.mxu0 0.0
    %290 = vmatpush1.msra.mxu0 %v90
    %291 = vmatprep.subr.mxu0 0.0
    %292 = vmatpush1.msra.mxu0 %v91
    %293 = vmatprep.subr.mxu0 0.0
    %294 = vmatpush1.msra.mxu0 %v92
    %295 = vmatprep.subr.mxu0 0.0
    %296 = vmatpush1.msra.mxu0 %v93
    %297 = vmatprep.subr.mxu0 0.0
    %298 = vmatpush1.msra.mxu0 %v94
    %299 = vmatprep.subr.mxu0 0.0
    %300 = vmatpush1.msra.mxu0 %v95
    %301 = vmatprep.subr.mxu0 0.0
    %302 = vmatpush1.msra.mxu0 %v96
    %303 = vmatprep.mubr.f32.mxu0 %v28
    %304 = vmatmul.mubr.f32.gmra.mrb[0].mxu0 %v27
    %v305 = vpop.f32.mrb[0].mxu0
    %v306 = vadd.f32 %v236, %v305
    %v307 = vpop.f32.mrb[0].mxu0
    %308 = vdwg.mxu0
    %309 = vmatprep.subr.mxu0 0.0
    %310 = vmatpush1.msra.mxu0 %v97
    %311 = vmatprep.subr.mxu0 0.0
    %312 = vmatpush1.msra.mxu0 %v98
    %313 = vmatprep.subr.mxu0 0.0
    %314 = vmatpush1.msra.mxu0 %v99
    %315 = vmatprep.subr.mxu0 0.0
    %316 = vmatpush1.msra.mxu0 %v100
    %317 = vmatprep.subr.mxu0 0.0
    %318 = vmatpush1.msra.mxu0 %v101
    %319 = vmatprep.subr.mxu0 0.0
    %320 = vmatpush1.msra.mxu0 %v102
    %321 = vmatprep.subr.mxu0 0.0
    %322 = vmatpush1.msra.mxu0 %v103
    %323 = vmatprep.subr.mxu0 0.0
    %324 = vmatpush1.msra.mxu0 %v104
    %325 = vmatprep.subr.mxu0 0.0
    %326 = vmatpush1.msra.mxu0 %v105
    %327 = vmatprep.subr.mxu0 0.0
    %328 = vmatpush1.msra.mxu0 %v106
    %329 = vmatprep.subr.mxu0 0.0
    %330 = vmatpush1.msra.mxu0 %v107
    %331 = vmatprep.subr.mxu0 0.0
    %332 = vmatpush1.msra.mxu0 %v108
    %333 = vmatprep.subr.mxu0 0.0
    %334 = vmatpush1.msra.mxu0 %v109
    %335 = vmatprep.subr.mxu0 0.0
    %336 = vmatpush1.msra.mxu0 %v110
    %337 = vmatprep.subr.mxu0 0.0
    %338 = vmatpush1.msra.mxu0 %v111
    %339 = vmatprep.subr.mxu0 0.0
    %340 = vmatpush1.msra.mxu0 %v112
    %341 = vmatprep.subr.mxu0 0.0
    %342 = vmatpush1.msra.mxu0 %v113
    %343 = vmatprep.subr.mxu0 0.0
    %344 = vmatpush1.msra.mxu0 %v114
    %345 = vmatprep.subr.mxu0 0.0
    %346 = vmatpush1.msra.mxu0 %v115
    %347 = vmatprep.subr.mxu0 0.0
    %348 = vmatpush1.msra.mxu0 %v116
    %349 = vmatprep.subr.mxu0 0.0
    %350 = vmatpush1.msra.mxu0 %v117
    %351 = vmatprep.subr.mxu0 0.0
    %352 = vmatpush1.msra.mxu0 %v118
    %353 = vmatprep.subr.mxu0 0.0
    %354 = vmatpush1.msra.mxu0 %v119
    %355 = vmatprep.subr.mxu0 0.0
    %356 = vmatpush1.msra.mxu0 %v120
    %357 = vmatprep.subr.mxu0 0.0
    %358 = vmatpush1.msra.mxu0 %v121
    %359 = vmatprep.subr.mxu0 0.0
    %360 = vmatpush1.msra.mxu0 %v122
    %361 = vmatprep.subr.mxu0 0.0
    %362 = vmatpush1.msra.mxu0 %v123
    %363 = vmatprep.subr.mxu0 0.0
    %364 = vmatpush1.msra.mxu0 %v124
    %365 = vmatprep.subr.mxu0 0.0
    %366 = vmatpush1.msra.mxu0 %v125
    %367 = vmatprep.subr.mxu0 0.0
    %368 = vmatpush1.msra.mxu0 %v126
    %369 = vmatprep.subr.mxu0 0.0
    %370 = vmatpush1.msra.mxu0 %v127
    %371 = vmatprep.subr.mxu0 0.0
    %372 = vmatpush1.msra.mxu0 %v128
    %373 = vmatprep.mubr.f32.mxu0 %v30
    %374 = vmatmul.mubr.f32.gmra.mrb[0].mxu0 %v29
    %v375 = vpop.f32.mrb[0].mxu0
    %v376 = vadd.f32 %v306, %v375
    %v377 = vpop.f32.mrb[0].mxu0
    %378 = vdwg.mxu0
    %379 = vmatprep.subr.mxu0 0.0
    %380 = vmatpush1.msra.mxu0 %v129
    %381 = vmatprep.subr.mxu0 0.0
    %382 = vmatpush1.msra.mxu0 %v130
    %383 = vmatprep.subr.mxu0 0.0
    %384 = vmatpush1.msra.mxu0 %v131
    %385 = vmatprep.subr.mxu0 0.0
    %386 = vmatpush1.msra.mxu0 %v132
    %387 = vmatprep.subr.mxu0 0.0
    %388 = vmatpush1.msra.mxu0 %v133
    %389 = vmatprep.subr.mxu0 0.0
    %390 = vmatpush1.msra.mxu0 %v134
    %391 = vmatprep.subr.mxu0 0.0
    %392 = vmatpush1.msra.mxu0 %v135
    %393 = vmatprep.subr.mxu0 0.0
    %394 = vmatpush1.msra.mxu0 %v136
    %395 = vmatprep.subr.mxu0 0.0
    %396 = vmatpush1.msra.mxu0 %v137
    %397 = vmatprep.subr.mxu0 0.0
    %398 = vmatpush1.msra.mxu0 %v138
    %399 = vmatprep.subr.mxu0 0.0
    %400 = vmatpush1.msra.mxu0 %v139
    %401 = vmatprep.subr.mxu0 0.0
    %402 = vmatpush1.msra.mxu0 %v140
    %403 = vmatprep.subr.mxu0 0.0
    %404 = vmatpush1.msra.mxu0 %v141
    %405 = vmatprep.subr.mxu0 0.0
    %406 = vmatpush1.msra.mxu0 %v142
    %407 = vmatprep.subr.mxu0 0.0
    %408 = vmatpush1.msra.mxu0 %v143
    %409 = vmatprep.subr.mxu0 0.0
    %410 = vmatpush1.msra.mxu0 %v144
    %411 = vmatprep.subr.mxu0 0.0
    %412 = vmatpush1.msra.mxu0 %v145
    %413 = vmatprep.subr.mxu0 0.0
    %414 = vmatpush1.msra.mxu0 %v146
    %415 = vmatprep.subr.mxu0 0.0
    %416 = vmatpush1.msra.mxu0 %v147
    %417 = vmatprep.subr.mxu0 0.0
    %418 = vmatpush1.msra.mxu0 %v148
    %419 = vmatprep.subr.mxu0 0.0
    %420 = vmatpush1.msra.mxu0 %v149
    %421 = vmatprep.subr.mxu0 0.0
    %422 = vmatpush1.msra.mxu0 %v150
    %423 = vmatprep.subr.mxu0 0.0
    %424 = vmatpush1.msra.mxu0 %v151
    %425 = vmatprep.subr.mxu0 0.0
    %426 = vmatpush1.msra.mxu0 %v152
    %427 = vmatprep.subr.mxu0 0.0
    %428 = vmatpush1.msra.mxu0 %v153
    %429 = vmatprep.subr.mxu0 0.0
    %430 = vmatpush1.msra.mxu0 %v154
    %431 = vmatprep.subr.mxu0 0.0
    %432 = vmatpush1.msra.mxu0 %v155
    %433 = vmatprep.subr.mxu0 0.0
    %434 = vmatpush1.msra.mxu0 %v156
    %435 = vmatprep.subr.mxu0 0.0
    %436 = vmatpush1.msra.mxu0 %v157
    %437 = vmatprep.subr.mxu0 0.0
    %438 = vmatpush1.msra.mxu0 0.0
    %439 = vmatprep.subr.mxu0 0.0
    %440 = vmatpush1.msra.mxu0 0.0
    %441 = vmatprep.subr.mxu0 0.0
    %442 = vmatpush1.msra.mxu0 0.0
    %443 = vmatprep.mubr.f32.mxu0 %v167
    %444 = vmatmul.mubr.f32.gmra.mrb[0].mxu0 %v31
    %v445 = vpop.f32.mrb[0].mxu0
    %v446 = vadd.f32 %v376, %v445
    %v447 = vpop.f32.mrb[0].mxu0
    %448 = vdwg.mxu0
    %v449 = vmax.f32 %v446, 0.0
    %v450 = vlaneseq
    %v451 = vshrl.u32 %v450, 7
    %s452 = smul.u32 0, 8
    %v453 = vstv %s452
    %v454 = vadd.s32 %v451, %v453
    %v455 = vlaneseq
    %v456 = vand.u32 %v455, 127
    %v457 = vmul.u32 %v454, 100
    %v458 = vadd.s32 %v457, %v456
    %s459 = sld [smem:[#allocation2]]
    %v460 = vmul.u32 %v458, 2654435761
    %v461 = vstv %s459
    %v462 = vadd.s32 %v460, %v461
    %v463 = vshrl.u32 %v462, 16
    %v464 = vxor.u32 %v462, %v463
    %v465 = vmul.u32 %v464, 2246822507
    %v466 = vshrl.u32 %v465, 13
    %v467 = vxor.u32 %v465, %v466
    %v468 = vmul.u32 %v467, 3266489909
    %v469 = vshrl.u32 %v468, 16
    %v470 = vxor.u32 %v468, %v469
    %v471 = vand.u32 %v470, 2147483647
    %vm472 = vcmp.ge.s32.totalorder %v471, 429496730
    %v473 = vsel %vm472, %v449, 0.0
    %v474 = vld [vmem:[%s4] sm:$0xff]
    %v475 = vld [vmem:[%s4 + $0x8] sm:$0xff]
    %v476 = vld [vmem:[%s4 + $0x10] sm:$0xff]
    %v477 = vld [vmem:[%s4 + $0x18] sm:$0xff]
    %v478 = vld [vmem:[%s4 + $0x20] sm:$0xff]
    %v479 = vld [vmem:[%s4 + $0x28] sm:$0xff]
    %v480 = vld [vmem:[%s4 + $0x30] sm:$0xff]
    %v481 = vld [vmem:[%s4 + $0x38] sm:$0xff]
    %v482 = vld [vmem:[%s4 + $0x40] sm:$0xff]
    %v483 = vld [vmem:[%s4 + $0x48] sm:$0xff]
    %v484 = vld [vmem:[%s4 + $0x50] sm:$0xff]
    %v485 = vld [vmem:[%s4 + $0x58] sm:$0xff]
    %v486 = vld [vmem:[%s4 + $0x60] sm:$0xf]
    %v487 = vld [vmem:[%s5] sm:$0x1]
    %v489 = vlaneseq
    %v490 = vshrl.u32 %v489, 7
    %v491 = vsub.s32 0, %v490
    %v492 = vrot.slane %v487, %v491
    %vm494 = vcmask 818176
    %v496 = vsel %vm494, %v473, 0
    %vm498 = vcmask 1043456
    %v500 = vsel %vm498, %v486, 0
    %502 = vmatprep.subr.mxu0 0.0
    %503 = vmatpush1.msra.mxu0 %v474
    %504 = vmatprep.subr.mxu0 0.0
    %505 = vmatpush1.msra.mxu0 %v475
    %506 = vmatprep.subr.mxu0 0.0
    %507 = vmatpush1.msra.mxu0 %v476
    %508 = vmatprep.subr.mxu0 0.0
    %509 = vmatpush1.msra.mxu0 %v477
    %510 = vmatprep.subr.mxu0 0.0
    %511 = vmatpush1.msra.mxu0 %v478
    %512 = vmatprep.subr.mxu0 0.0
    %513 = vmatpush1.msra.mxu0 %v479
    %514 = vmatprep.subr.mxu0 0.0
    %515 = vmatpush1.msra.mxu0 %v480
    %516 = vmatprep.subr.mxu0 0.0
    %517 = vmatpush1.msra.mxu0 %v481
    %518 = vmatprep.subr.mxu0 0.0
    %519 = vmatpush1.msra.mxu0 %v482
    %520 = vmatprep.subr.mxu0 0.0
    %521 = vmatpush1.msra.mxu0 %v483
    %522 = vmatprep.subr.mxu0 0.0
    %523 = vmatpush1.msra.mxu0 %v484
    %524 = vmatprep.subr.mxu0 0.0
    %525 = vmatpush1.msra.mxu0 %v485
    %526 = vmatprep.subr.mxu0 0.0
    %527 = vmatpush1.msra.mxu0 %v500
    %528 = vmatprep.subr.mxu0 0.0
    %529 = vmatpush1.msra.mxu0 0.0
    %530 = vmatprep.subr.mxu0 0.0
    %531 = vmatpush1.msra.mxu0 0.0
    %532 = vmatprep.subr.mxu0 0.0
    %533 = vmatpush1.msra.mxu0 0.0
    %534 = vmatprep.subr.mxu0 0.0
    %535 = vmatpush1.msra.mxu0 0.0
    %536 = vmatprep.subr.mxu0 0.0
    %537 = vmatpush1.msra.mxu0 0.0
    %538 = vmatprep.subr.mxu0 0.0
    %539 = vmatpush1.msra.mxu0 0.0
    %540 = vmatprep.subr.mxu0 0.0
    %541 = vmatpush1.msra.mxu0 0.0
    %542 = vmatprep.subr.mxu0 0.0
    %543 = vmatpush1.msra.mxu0 0.0
    %544 = vmatprep.subr.mxu0 0.0
    %545 = vmatpush1.msra.mxu0 0.0
    %546 = vmatprep.subr.mxu0 0.0
    %547 = vmatpush1.msra.mxu0 0.0
    %548 = vmatprep.subr.mxu0 0.0
    %549 = vmatpush1.msra.mxu0 0.0
    %550 = vmatprep.subr.mxu0 0.0
    %551 = vmatpush1.msra.mxu0 0.0
    %552 = vmatprep.subr.mxu0 0.0
    %553 = vmatpush1.msra.mxu0 0.0
    %554 = vmatprep.subr.mxu0 0.0
    %555 = vmatpush1.msra.mxu0 0.0
    %556 = vmatprep.subr.mxu0 0.0
    %557 = vmatpush1.msra.mxu0 0.0
    %558 = vmatprep.subr.mxu0 0.0
    %559 = vmatpush1.msra.mxu0 0.0
    %560 = vmatprep.subr.mxu0 0.0
    %561 = vmatpush1.msra.mxu0 0.0
    %562 = vmatprep.subr.mxu0 0.0
    %563 = vmatpush1.msra.mxu0 0.0
    %564 = vmatprep.subr.mxu0 0.0
    %565 = vmatpush1.msra.mxu0 0.0
    %566 = vmatprep.mubr.f32.mxu0 0.0
    %567 = vmatmul.mubr.f32.gmra.mrb[0].mxu0 %v496
    %v568 = vpop.f32.mrb[0].mxu0
    %v569 = vadd.f32 %v492, %v568
    %v570 = vpop.f32.mrb[0].mxu0
    %571 = vdwg.mxu0
    %vm572 = vcmask 80896
    %573 = vst.msk [vmem:[#allocation3] sm:$0xff] %vm572, %v569
    // Predicated region
    $region26: #{net_forward.1} parent=1 // pred_check
      _
    $region27: #{net_forward.1} parent=1 // pred_check_branch
      %575 = sbr.rel (0) target = $region29
    $region28: #{net_forward.1} parent=1 // pred_region
      %s577 = ssub.s32 128, 128
      %578 = vsyncadd [#allocation4], %s577
      %s580 = sshll.u32 [#allocation3], 4
      %s581 = int_to_ptr.vmem [resolvable:$true] %s580
      %583 = dma.vmem_to_hbm [thread:$0]  %s581, 128, %s6, [#allocation4]
    $region29: #{net_forward.1} parent=1 // pred_fallthru
      _
    // Predicated region
    $region30: #{net_forward.1} parent=1 // pred_check
      _
    $region31: #{net_forward.1} parent=1 // pred_check_branch
      %585 = sbr.rel (0) target = $region33
    $region32: #{net_forward.1} parent=1 // pred_region
      %586 = dma.done [#allocation4], 128
    $region33: #{net_forward.1} parent=1 // pred_fallthru
      _
    %587 = vsyncpa [#allocation4], 1

</llo_original>
